<compile_context>
chip_gen: v6e
topology: v6e:2x2x1
jax: 0.10.0
libtpu: 0.0.40
codegen_flags: <defaults>
</compile_context>

<pallas_src>
import math

import jax
import jax.numpy as jnp
from jax.experimental import pallas as pl
from jax.experimental.pallas import tpu as pltpu

_SQRT_2_OVER_PI = 0.7978845608028654  # sqrt(2/pi), GPT-2 tanh GELU


def _round_up(x, m):
    return (x + m - 1) // m * m


def _pad_dim(n):
    # Lane-dense + MXU-friendly padding: multiples of 256 for big dims
    # (v6e/v7x MXUs are 2x256x256), 128 otherwise (v5e 128x128 MXU).
    return _round_up(n, 256) if n >= 256 else _round_up(n, 128)


def _gelu_tanh(h):
    # GPT-2 tanh-approximation GELU (f32 math; EUP tanh is free filler under
    # the MXU).  Cubic factored as h * (1 + 0.044715*h*h).
    return 0.5 * h * (1.0 + jnp.tanh(_SQRT_2_OVER_PI * h * (1.0 + 0.044715 * h * h)))


def _vmem_capacity_bytes():
    # Generation-aware VMEM capacity (v5e/v6e: 128 MiB, v7x: 64 MiB per TC).
    try:
        cap = int(getattr(pltpu.get_tpu_info(), "vmem_capacity_bytes", 0))
        if cap > 0:
            return cap
    except Exception:
        pass
    return 64 * 2**20  # conservative floor (v7x per-TensorCore VMEM)


# ----------------------------- kernels -------------------------------------


def _mlp_resident_kernel(x_ref, w1_ref, b1_ref, w2_ref, b2_ref, o_ref):
    # Whole W1/W2 live in VMEM (fetched once); fused c_fc -> GELU -> c_proj
    # per row tile.
    h = jnp.dot(x_ref[...], w1_ref[...],
                preferred_element_type=jnp.float32) + b1_ref[...]
    g = _gelu_tanh(h)
    out = jnp.dot(g.astype(w2_ref.dtype), w2_ref[...],
                  preferred_element_type=jnp.float32) + b2_ref[...]
    o_ref[...] = out.astype(o_ref.dtype)


def _mlp_streamed_inplace_kernel(x_ref, w1_ref, b1_ref, w2_ref, b2_ref, o_ref):
    # Hidden axis streamed; the f32 output tile (resident across the h axis)
    # doubles as the accumulator -> no scratch, no final copy.
    h_idx = pl.program_id(1)
    h = jnp.dot(x_ref[...], w1_ref[...],
                preferred_element_type=jnp.float32) + b1_ref[...]
    g = _gelu_tanh(h)
    partial = jnp.dot(g.astype(w2_ref.dtype), w2_ref[...],
                      preferred_element_type=jnp.float32)

    @pl.when(h_idx == 0)
    def _():
        o_ref[...] = partial + b2_ref[...]  # seed with b2; no zero-init RMW

    @pl.when(h_idx > 0)
    def _():
        o_ref[...] += partial


def _mlp_streamed_acc_kernel(x_ref, w1_ref, b1_ref, w2_ref, b2_ref, o_ref,
                             acc_ref):
    # Streamed hidden axis with an f32 scratch accumulator (non-f32 outputs).
    h_idx = pl.program_id(1)
    h = jnp.dot(x_ref[...], w1_ref[...],
                preferred_element_type=jnp.float32) + b1_ref[...]
    g = _gelu_tanh(h)
    partial = jnp.dot(g.astype(w2_ref.dtype), w2_ref[...],
                      preferred_element_type=jnp.float32)

    @pl.when(h_idx == 0)
    def _():
        acc_ref[...] = partial + b2_ref[...]

    @pl.when(h_idx > 0)
    def _():
        acc_ref[...] += partial

    @pl.when(h_idx == pl.num_programs(1) - 1)
    def _():
        o_ref[...] = acc_ref[...].astype(o_ref.dtype)


# ----------------------------- host wrappers --------------------------------


def prepare_mlp_params(w1, b1, w2, b2, *, compute_dtype=jnp.bfloat16):
    """One-time parameter packing (pad + cast), hoisted out of the per-call path.

    Weights are (in, out): y = x @ w + b (== torch x @ W.T + b).
    """
    C, H = w1.shape
    assert w2.shape == (H, C) and b1.shape == (H,) and b2.shape == (C,)
    C_pad, H_pad = _pad_dim(C), _pad_dim(H)
    wdt = w1.dtype if compute_dtype is None else jnp.dtype(compute_dtype)
    w1p = jnp.pad(w1.astype(wdt), ((0, C_pad - C), (0, H_pad - H)))
    w2p = jnp.pad(w2.astype(wdt), ((0, H_pad - H), (0, C_pad - C)))
    b1p = jnp.pad(b1.astype(jnp.float32), (0, H_pad - H)).reshape(1, H_pad)
    b2p = jnp.pad(b2.astype(jnp.float32), (0, C_pad - C)).reshape(1, C_pad)
    return dict(w1=w1p, b1=b1p, w2=w2p, b2=b2p,
                C=C, H=H, C_pad=C_pad, H_pad=H_pad, compute_dtype=wdt)


def mlp_forward_prepared(x, params, *, tm=None, th=None, weights_resident=None):
    """GELU(x @ w1 + b1) @ w2 + b2 with pre-prepared (padded/cast) params."""
    B, T, C = x.shape
    assert C == params["C"]
    C_pad, H_pad = params["C_pad"], params["H_pad"]
    cdt = params["compute_dtype"]
    out_dtype = x.dtype
    x = x.astype(cdt)

    ib = jnp.dtype(cdt).itemsize
    ob = jnp.dtype(out_dtype).itemsize

    vmem_cap = _vmem_capacity_bytes()
    vmem_budget = int(0.80 * vmem_cap)

    M = B * T
    M8 = _round_up(M, 8)

    # Row tile: MXU-aligned, generation-aware default; never the whole slab.
    if tm is None:
        if cdt == jnp.bfloat16:
            tm = 2048 if vmem_cap >= 100 * 2**20 else 1024
        else:
            tm = 512
    tm = max(8, _round_up(tm, 8))
    tm = min(tm, M8)
    # Keep >= 2 tiles on the "parallel" row axis so dual-TC chips can shard it.
    if M8 >= 16:
        tm = min(tm, _round_up((M8 + 1) // 2, 8))

    def resident_bytes(tm_):
        # Default double-buffering assumed for every input/output block.
        return (2 * 2 * C_pad * H_pad * ib        # W1 + W2 buffers
                + 2 * tm_ * C_pad * ib            # x tiles
                + 2 * tm_ * C_pad * ob            # out tiles
                + 4 * (H_pad + C_pad) * 4         # biases
                + 2 * tm_ * H_pad * 4             # f32 GELU intermediates
                + tm_ * C_pad * 4)                # f32 c_proj result pre-cast

    def streamed_bytes(tm_, th_):
        return (2 * tm_ * C_pad * ib              # x tiles
                + 2 * C_pad * th_ * ib            # W1 tiles
                + 2 * th_ * C_pad * ib            # W2 tiles
                + 4 * (th_ + C_pad) * 4           # biases
                + 2 * tm_ * C_pad * ob            # out tiles
                + tm_ * C_pad * 4                 # f32 accumulator
                + 2 * tm_ * th_ * 4)              # f32 GELU intermediates

    def fit_th(t):
        t = max(128, min(_round_up(t, 128), H_pad))
        while H_pad % t != 0:
            t -= 128
        return t

    if weights_resident is None:
        weights_resident = resident_bytes(tm) <= vmem_budget

    if weights_resident:
        need = resident_bytes(tm)
        n_h = 1
    else:
        th = fit_th(1024 if th is None else th)
        # Shrink th, then tm, until the streamed working set fits the budget.
        while streamed_bytes(tm, th) > vmem_budget and th > 128:
            th = fit_th(th // 2)
        while streamed_bytes(tm, th) > vmem_budget and tm > 256:
            tm = max(256, _round_up(tm // 2, 8))
        n_h = H_pad // th
        need = streamed_bytes(tm, th)

    M_pad = _round_up(M, tm)
    n_row = M_pad // tm

    # Per-call activation padding (zero padding is exact: zero rows/cols
    # contribute nothing, GELU(0) == 0, padded outputs are sliced away).
    x2d = x.reshape(M, C)
    if (M_pad, C_pad) != (M, C):
        x2d = jnp.pad(x2d, ((0, M_pad - M), (0, C_pad - C)))

    vmem_limit = int(min(vmem_cap - (4 << 20), max(need * 5 // 4, 24 << 20)))
    vmem_limit = max(vmem_limit, 16 << 20)

    w_bytes = 2 * C_pad * H_pad * ib
    cost = pl.CostEstimate(
        flops=4 * M_pad * C_pad * H_pad,                     # two matmuls
        transcendentals=M_pad * H_pad,                       # tanh
        bytes_accessed=(M_pad * C_pad * ib                   # x read
                        + (1 if weights_resident else n_row) * w_bytes
                        + M_pad * C_pad * ob),               # out write
    )

    x_tile = (tm, C_pad)
    if weights_resident:
        grid = (n_row,)
        in_specs = [
            pl.BlockSpec(x_tile, lambda i: (i, 0)),           # x row tile
            pl.BlockSpec((C_pad, H_pad), lambda i: (0, 0)),   # W1 (resident)
            pl.BlockSpec((1, H_pad), lambda i: (0, 0)),       # b1
            pl.BlockSpec((H_pad, C_pad), lambda i: (0, 0)),   # W2 (resident)
            pl.BlockSpec((1, C_pad), lambda i: (0, 0)),       # b2
        ]
        out_specs = pl.BlockSpec(x_tile, lambda i: (i, 0))
        scratch = []
        kernel = _mlp_resident_kernel
        dims = ("parallel",)
    else:
        grid = (n_row, n_h)                      # hidden (reduction) axis last
        in_specs = [
            pl.BlockSpec(x_tile, lambda i, h: (i, 0)),        # x row tile
            pl.BlockSpec((C_pad, th), lambda i, h: (0, h)),   # W1 tile
            pl.BlockSpec((1, th), lambda i, h: (0, h)),       # b1 tile
            pl.BlockSpec((th, C_pad), lambda i, h: (h, 0)),   # W2 tile
            pl.BlockSpec((1, C_pad), lambda i, h: (0, 0)),    # b2
        ]
        out_specs = pl.BlockSpec(x_tile, lambda i, h: (i, 0))
        if out_dtype == jnp.float32:
            kernel = _mlp_streamed_inplace_kernel
            scratch = []
        else:
            kernel = _mlp_streamed_acc_kernel
            scratch = [pltpu.VMEM((tm, C_pad), jnp.float32)]
        dims = ("parallel", "arbitrary")

    out2d = pl.pallas_call(
        kernel,
        out_shape=jax.ShapeDtypeStruct((M_pad, C_pad), out_dtype),
        grid_spec=pltpu.PrefetchScalarGridSpec(
            num_scalar_prefetch=0,
            grid=grid,
            in_specs=in_specs,
            out_specs=out_specs,
            scratch_shapes=scratch,
        ),
        compiler_params=pltpu.CompilerParams(
            dimension_semantics=dims,
            vmem_limit_bytes=vmem_limit),
        cost_estimate=cost,
    )(x2d, params["w1"], params["b1"], params["w2"], params["b2"])

    return out2d[:M, :C].reshape(B, T, C)


def mlp_forward(x, w1, b1, w2, b2, *, compute_dtype="auto", tm=None, th=None,
                weights_resident=None):
    """Convenience wrapper (prepares params per call).  In real use call
    prepare_mlp_params(...) once and mlp_forward_prepared(...) per step."""
    if compute_dtype == "auto":
        # bf16 MXU inputs by default when x is f32 (f32 accumulation inside).
        compute_dtype = jnp.bfloat16 if x.dtype == jnp.float32 else x.dtype
    params = prepare_mlp_params(w1, b1, w2, b2, compute_dtype=compute_dtype)
    return mlp_forward_prepared(x, params, tm=tm, th=th,
                                weights_resident=weights_resident)


# ----------------------------- reference & tests ----------------------------


def _reference_mlp(x, w1, b1, w2, b2, compute_dtype=None):
    # Matches the kernel numerics: optional low-precision MXU inputs, f32
    # accumulation, f32 bias adds, f32 GELU, GELU output cast before c_proj.
    if compute_dtype is not None:
        x = x.astype(compute_dtype)
        w1 = w1.astype(compute_dtype)
        w2 = w2.astype(compute_dtype)
    h = jnp.einsum("btc,ch->bth", x, w1,
                   preferred_element_type=jnp.float32) + b1.astype(jnp.float32)
    g = _gelu_tanh(h)
    return jnp.einsum("bth,hc->btc", g.astype(w2.dtype), w2,
                      preferred_element_type=jnp.float32) + b2.astype(jnp.float32)


def _make_inputs(key, B, T, C, dtype=jnp.float32):
    H = 4 * C
    kx, k1, kb1, k2, kb2 = jax.random.split(key, 5)
    x = jax.random.normal(kx, (B, T, C), dtype)
    # nn.Linear-like init: U(-1/sqrt(fan_in), 1/sqrt(fan_in)).
    w1 = jax.random.uniform(k1, (C, H), dtype, -1.0, 1.0) / math.sqrt(C)
    b1 = jax.random.uniform(kb1, (H,), dtype, -1.0, 1.0) / math.sqrt(C)
    w2 = jax.random.uniform(k2, (H, C), dtype, -1.0, 1.0) / math.sqrt(H)
    b2 = jax.random.uniform(kb2, (C,), dtype, -1.0, 1.0) / math.sqrt(H)
    return x, w1, b1, w2, b2


if __name__ == "__main__":
    # 1) Small GPT-2-like config: n_embd=32 -> hidden=128; batch=2, seq=8.
    #    Default bf16 MXU path, one-time parameter prep, resident weights.
    B, T, C = 2, 8, 32
    x, w1, b1, w2, b2 = _make_inputs(jax.random.PRNGKey(0), B, T, C)
    params_bf16 = prepare_mlp_params(w1, b1, w2, b2, compute_dtype=jnp.bfloat16)
    out = mlp_forward_prepared(x, params_bf16)
    jax.block_until_ready(out)
    assert out.shape == x.shape and out.dtype == x.dtype
    ref_bf16 = _reference_mlp(x, w1, b1, w2, b2, compute_dtype=jnp.bfloat16)
    assert jnp.allclose(out, ref_bf16, atol=2e-2, rtol=2e-2)

    # 2) Full-precision (f32 MXU inputs) path against the f32 reference.
    params_f32 = prepare_mlp_params(w1, b1, w2, b2, compute_dtype=jnp.float32)
    out_f32 = mlp_forward_prepared(x, params_f32)
    jax.block_until_ready(out_f32)
    ref_f32 = _reference_mlp(x, w1, b1, w2, b2)
    assert jnp.allclose(out_f32, ref_f32, atol=5e-3, rtol=5e-3)

    # 3) Larger shape, forced streamed-hidden path (exercises multiple row
    #    tiles, the streamed reduction axis and in-place f32 accumulation).
    x2, w1b, b1b, w2b, b2b = _make_inputs(jax.random.PRNGKey(1), 2, 256, 256)
    params2 = prepare_mlp_params(w1b, b1b, w2b, b2b, compute_dtype=jnp.bfloat16)
    out2 = mlp_forward_prepared(x2, params2, tm=128, th=256,
                                weights_resident=False)
    jax.block_until_ready(out2)
    ref2 = _reference_mlp(x2, w1b, b1b, w2b, b2b, compute_dtype=jnp.bfloat16)
    assert jnp.allclose(out2, ref2, atol=2e-2, rtol=2e-2)

    # 4) bf16 activations (bf16 output) on the streamed path -> exercises the
    #    f32 scratch-accumulator kernel variant.
    x2_bf16 = x2.astype(jnp.bfloat16)
    out3 = mlp_forward_prepared(x2_bf16, params2, tm=128, th=256,
                                weights_resident=False)
    jax.block_until_ready(out3)
    assert out3.dtype == jnp.bfloat16
    assert jnp.allclose(out3.astype(jnp.float32), ref2, atol=2e-2, rtol=2e-2)

    print("KERNEL_OK")
</pallas_src>

<mosaic_0001>
module attributes {stable_mosaic.version = 11 : i64} {
  func.func @_mlp_resident_kernel(%arg0: i32, %arg1: memref<8x128xbf16, #tpu.memory_space<vmem>>, %arg2: memref<128x128xbf16, #tpu.memory_space<vmem>>, %arg3: memref<1x128xf32, #tpu.memory_space<vmem>>, %arg4: memref<128x128xbf16, #tpu.memory_space<vmem>>, %arg5: memref<1x128xf32, #tpu.memory_space<vmem>>, %arg6: memref<8x128xf32, #tpu.memory_space<vmem>>) attributes {dimension_semantics = [#tpu.dimension_semantics<parallel>], iteration_bounds = array<i64: 2>, scalar_prefetch = 0 : i64, scratch_operands = 0 : i64, tpu.core_type = #tpu.core_type<tc>, window_params = [{transform_indices = @transform_0, window_bounds = array<i64: 8, 128>}, {pipeline_mode = #tpu.pipeline_mode<synchronous>, transform_indices = @transform_1, window_bounds = array<i64: 128, 128>}, {pipeline_mode = #tpu.pipeline_mode<synchronous>, transform_indices = @transform_2, window_bounds = array<i64: 1, 128>}, {pipeline_mode = #tpu.pipeline_mode<synchronous>, transform_indices = @transform_3, window_bounds = array<i64: 128, 128>}, {pipeline_mode = #tpu.pipeline_mode<synchronous>, transform_indices = @transform_4, window_bounds = array<i64: 1, 128>}, {transform_indices = @transform_5, window_bounds = array<i64: 8, 128>}]} {
    %c0 = arith.constant 0 : index
    %c0_0 = arith.constant 0 : index
    %0 = vector.load %arg1[%c0, %c0_0] : memref<8x128xbf16, #tpu.memory_space<vmem>>, vector<8x128xbf16>
    %c0_1 = arith.constant 0 : index
    %c0_2 = arith.constant 0 : index
    %1 = vector.load %arg2[%c0_1, %c0_2] : memref<128x128xbf16, #tpu.memory_space<vmem>>, vector<128x128xbf16>
    %cst = arith.constant dense<0.000000e+00> : vector<8x128xf32>
    %2 = tpu.matmul %0, %1, %cst {dimension_numbers = #tpu.dot_dimension_numbers<[1], [0], [0], [1], [0, 0, 1, 1], [], []>} : vector<8x128xbf16>, vector<128x128xbf16>, vector<8x128xf32> -> vector<8x128xf32>
    %c0_3 = arith.constant 0 : index
    %c0_4 = arith.constant 0 : index
    %3 = vector.load %arg3[%c0_3, %c0_4] : memref<1x128xf32, #tpu.memory_space<vmem>>, vector<1x128xf32>
    %4 = vector.broadcast %3 : vector<1x128xf32> to vector<8x128xf32>
    %5 = arith.addf %2, %4 : vector<8x128xf32>
    %cst_5 = arith.constant 5.000000e-01 : f32
    %6 = vector.broadcast %cst_5 : f32 to vector<8x128xf32>
    %7 = arith.mulf %6, %5 : vector<8x128xf32>
    %cst_6 = arith.constant 0.797884583 : f32
    %8 = vector.broadcast %cst_6 : f32 to vector<8x128xf32>
    %9 = arith.mulf %8, %5 : vector<8x128xf32>
    %cst_7 = arith.constant 4.471500e-02 : f32
    %10 = vector.broadcast %cst_7 : f32 to vector<8x128xf32>
    %11 = arith.mulf %10, %5 : vector<8x128xf32>
    %12 = arith.mulf %11, %5 : vector<8x128xf32>
    %cst_8 = arith.constant 1.000000e+00 : f32
    %13 = vector.broadcast %cst_8 : f32 to vector<8x128xf32>
    %14 = arith.addf %13, %12 : vector<8x128xf32>
    %15 = arith.mulf %9, %14 : vector<8x128xf32>
    %16 = math.tanh %15 : vector<8x128xf32>
    %cst_9 = arith.constant 1.000000e+00 : f32
    %17 = vector.broadcast %cst_9 : f32 to vector<8x128xf32>
    %18 = arith.addf %17, %16 : vector<8x128xf32>
    %19 = arith.mulf %7, %18 : vector<8x128xf32>
    %20 = arith.truncf %19 : vector<8x128xf32> to vector<8x128xbf16>
    %c0_10 = arith.constant 0 : index
    %c0_11 = arith.constant 0 : index
    %21 = vector.load %arg4[%c0_10, %c0_11] : memref<128x128xbf16, #tpu.memory_space<vmem>>, vector<128x128xbf16>
    %cst_12 = arith.constant dense<0.000000e+00> : vector<8x128xf32>
    %22 = tpu.matmul %20, %21, %cst_12 {dimension_numbers = #tpu.dot_dimension_numbers<[1], [0], [0], [1], [0, 0, 1, 1], [], []>} : vector<8x128xbf16>, vector<128x128xbf16>, vector<8x128xf32> -> vector<8x128xf32>
    %c0_13 = arith.constant 0 : index
    %c0_14 = arith.constant 0 : index
    %23 = vector.load %arg5[%c0_13, %c0_14] : memref<1x128xf32, #tpu.memory_space<vmem>>, vector<1x128xf32>
    %24 = vector.broadcast %23 : vector<1x128xf32> to vector<8x128xf32>
    %25 = arith.addf %22, %24 : vector<8x128xf32>
    %c0_15 = arith.constant 0 : index
    %c0_16 = arith.constant 0 : index
    %26 = vector.load %arg6[%c0_15, %c0_16] : memref<8x128xf32, #tpu.memory_space<vmem>>, vector<8x128xf32>
    tpu.vector_store %arg6[%c0_15, %c0_16], %25 {strides = array<i32>} : memref<8x128xf32, #tpu.memory_space<vmem>>, vector<8x128xf32>,
    return
  }
  func.func @transform_0(%arg0: i32) -> (i32, i32) {
    %c0_i32 = arith.constant 0 : i32
    %c0_i32_0 = arith.constant 0 : i32
    return %arg0, %c0_i32 : i32, i32
  }
  func.func @transform_1(%arg0: i32) -> (i32, i32) {
    %c0_i32 = arith.constant 0 : i32
    %c0_i32_0 = arith.constant 0 : i32
    %c0_i32_1 = arith.constant 0 : i32
    return %c0_i32, %c0_i32_0 : i32, i32
  }
  func.func @transform_2(%arg0: i32) -> (i32, i32) {
    %c0_i32 = arith.constant 0 : i32
    %c0_i32_0 = arith.constant 0 : i32
    %c0_i32_1 = arith.constant 0 : i32
    return %c0_i32, %c0_i32_0 : i32, i32
  }
  func.func @transform_3(%arg0: i32) -> (i32, i32) {
    %c0_i32 = arith.constant 0 : i32
    %c0_i32_0 = arith.constant 0 : i32
    %c0_i32_1 = arith.constant 0 : i32
    return %c0_i32, %c0_i32_0 : i32, i32
  }
  func.func @transform_4(%arg0: i32) -> (i32, i32) {
    %c0_i32 = arith.constant 0 : i32
    %c0_i32_0 = arith.constant 0 : i32
    %c0_i32_1 = arith.constant 0 : i32
    return %c0_i32, %c0_i32_0 : i32, i32
  }
  func.func @transform_5(%arg0: i32) -> (i32, i32) {
    %c0_i32 = arith.constant 0 : i32
    %c0_i32_0 = arith.constant 0 : i32
    return %arg0, %c0_i32 : i32, i32
  }
}

</mosaic_0001>

<llo_original>
// kernel: tpu_custom_call.1
$region0: #{tpu_custom_call.1}
  #allocation0 [shape = 'u32[]', space=smem, size = 0x4, offset = 0x4, fixed_abs, tag = 'smem constant byte address 0x4 - core index']
  #allocation1 [shape = 'u32[144,128]{1,0:T(1,128)}', space=vmem, size = 0x12000, scoped, tag = 'internal scratch']
  %s0 = inlined_call_operand.hbm [shape: bf16[16,128], index: 0, kind: input, shape index: {}]
  %s1 = inlined_call_operand.hbm [shape: bf16[128,128], index: 1, kind: input, shape index: {}]
  %s2 = inlined_call_operand.vmem [shape: f32[1,128], index: 2, kind: input, shape index: {}]
  %s3 = inlined_call_operand.hbm [shape: bf16[128,128], index: 3, kind: input, shape index: {}]
  %s4 = inlined_call_operand.vmem [shape: f32[1,128], index: 4, kind: input, shape index: {}]
  %s5 = inlined_call_operand.hbm [shape: f32[16,128], index: 5, kind: output, shape index: {}]
  %s6 = sld [smem:[#allocation0]]
  $region65: #{tpu_custom_call.1} parent=0
    _
  %s8 = ssub.s32 1, %s6
  %s9 = scalar_select 0, %s8, %s6
  $region1: #{tpu_custom_call.1} parent=0
    #allocation2 [shape = 'u8[4096]{0}', space=vmem, size = 0x1000, scoped, tag = 'input window, operand 0']
    #allocation3 [shape = 's32[2]{0}', space=sflag, size = 0x8, scoped, tag = 'scoped memory for tpu_custom_call.1']
    #allocation4 [shape = 's32[2]{0}', space=sflag, size = 0x8, scoped, tag = 'scoped memory for tpu_custom_call.1']
    #allocation5 [shape = 'u8[32768]{0}', space=vmem, size = 0x8000, scoped, tag = 'input window, operand 1, single buffered']
    #allocation6 [shape = 's32[1]{0}', space=sflag, size = 0x4, scoped, tag = 'scoped memory for tpu_custom_call.1']
    #allocation7 [shape = 'u8[32768]{0}', space=vmem, size = 0x8000, scoped, tag = 'input window, operand 3, single buffered']
    #allocation8 [shape = 'u8[8192]{0}', space=vmem, size = 0x2000, scoped, tag = 'output window, operand 0']
    %10 = vsyncpa [#allocation3], 0
    %s11 = scalar_lea.sflag [#allocation3], 1
    %12 = vsyncpa %s11, 0
    %13 = vsyncpa [#allocation6], 0
    %14 = vsyncpa [#allocation4], 0
    %s15 = scalar_lea.sflag [#allocation4], 1
    %16 = vsyncpa %s15, 0
    loop: start=0, step=1, limit=4
    $region2: #{tpu_custom_call.1} parent=1 // loop_pre_header
      _
    $region3: #{tpu_custom_call.1} parent=1 // loop_header
      %s18 = sphi 0, %s22
      %p19 = scmp.ge.s32.totalorder %s18, 4
      %s28 = sphi 0, %s30
      %s31 = sphi 0, %s28
      %s32 = sphi 0, %s31
      %s48 = sphi 0, %s32
      %s52 = sphi 0, %s52
      %s54 = sphi 0, %s52
      %s55 = sphi 0, %s54
      %s69 = sphi 0, %s55
      %s73 = sphi 0, %s73
      %s75 = sphi 0, %s73
      %s76 = sphi 0, %s75
      %s90 = sphi 0, %s76
      %s94 = sphi 0, %s94
      %s96 = sphi 0, %s94
      %s97 = sphi 0, %s96
      %s111 = sphi 0, %s97
      %s115 = sphi 0, %s115
      %s117 = sphi 0, %s115
      %s118 = sphi 0, %s117
      %s132 = sphi 0, %s118
      %s138 = sphi 0, %s140
      %s141 = sphi 0, %s138
      %s142 = sphi 0, %s141
      %s158 = sphi 0, %s142
    $region4: #{tpu_custom_call.1} parent=1 // loop_header_branch
      %21 = sbr.rel (%p19) target = $region8
    $region5: #{tpu_custom_call.1} parent=1 // loop_body
      %s23 = ssub.s32 %s18, 1
      %s24 = ssub.s32 %s18, 2
      %s25 = sadd.s32 %s18, 1
      %s26 = ssub.s32 %s18, %s25
      %p27 = scmp.eq.s32.totalorder %s26, 0
      %s29 = sadd.s32 %s28, 1
      %s30 = scalar_select %p27, %s28, %s29
      %p33 = pneg %p27
      %p34 = scmp.eq.s32.totalorder %s18, 1
      %p35 = por %p33, %p34
      %p36 = scmp.ne.s32.totalorder %s28, %s31
      %p37 = scmp.eq.s32.totalorder %s18, 0
      %p38 = por %p36, %p37
      %p39 = scmp.ne.s32.totalorder %s28, %s31
      %p40 = scmp.eq.s32.totalorder %s23, 1
      %p41 = por %p39, %p40
      %p42 = scmp.ne.s32.totalorder %s31, %s32
      %p43 = scmp.eq.s32.totalorder %s23, 0
      %p44 = por %p42, %p43
      %p45 = scmp.ne.s32.totalorder %s31, %s32
      %p46 = scmp.eq.s32.totalorder %s24, 1
      %p47 = por %p45, %p46
      %p49 = scmp.ne.s32.totalorder %s32, %s48
      %p50 = scmp.eq.s32.totalorder %s24, 0
      %p51 = por %p49, %p50
      %s53 = sadd.s32 %s52, 1
      %p56 = scmp.eq.s32.totalorder %s18, 1
      %p57 = scmp.ne.s32.totalorder %s52, %s54
      %p58 = scmp.eq.s32.totalorder %s18, 0
      %p59 = por %p57, %p58
      %p60 = scmp.ne.s32.totalorder %s52, %s54
      %p61 = scmp.eq.s32.totalorder %s23, 1
      %p62 = por %p60, %p61
      %p63 = scmp.ne.s32.totalorder %s54, %s55
      %p64 = scmp.eq.s32.totalorder %s23, 0
      %p65 = por %p63, %p64
      %p66 = scmp.ne.s32.totalorder %s54, %s55
      %p67 = scmp.eq.s32.totalorder %s24, 1
      %p68 = por %p66, %p67
      %p70 = scmp.ne.s32.totalorder %s55, %s69
      %p71 = scmp.eq.s32.totalorder %s24, 0
      %p72 = por %p70, %p71
      %s74 = sadd.s32 %s73, 1
      %p77 = scmp.eq.s32.totalorder %s18, 1
      %p78 = scmp.ne.s32.totalorder %s73, %s75
      %p79 = scmp.eq.s32.totalorder %s18, 0
      %p80 = por %p78, %p79
      %p81 = scmp.ne.s32.totalorder %s73, %s75
      %p82 = scmp.eq.s32.totalorder %s23, 1
      %p83 = por %p81, %p82
      %p84 = scmp.ne.s32.totalorder %s75, %s76
      %p85 = scmp.eq.s32.totalorder %s23, 0
      %p86 = por %p84, %p85
      %p87 = scmp.ne.s32.totalorder %s75, %s76
      %p88 = scmp.eq.s32.totalorder %s24, 1
      %p89 = por %p87, %p88
      %p91 = scmp.ne.s32.totalorder %s76, %s90
      %p92 = scmp.eq.s32.totalorder %s24, 0
      %p93 = por %p91, %p92
      %s95 = sadd.s32 %s94, 1
      %p98 = scmp.eq.s32.totalorder %s18, 1
      %p99 = scmp.ne.s32.totalorder %s94, %s96
      %p100 = scmp.eq.s32.totalorder %s18, 0
      %p101 = por %p99, %p100
      %p102 = scmp.ne.s32.totalorder %s94, %s96
      %p103 = scmp.eq.s32.totalorder %s23, 1
      %p104 = por %p102, %p103
      %p105 = scmp.ne.s32.totalorder %s96, %s97
      %p106 = scmp.eq.s32.totalorder %s23, 0
      %p107 = por %p105, %p106
      %p108 = scmp.ne.s32.totalorder %s96, %s97
      %p109 = scmp.eq.s32.totalorder %s24, 1
      %p110 = por %p108, %p109
      %p112 = scmp.ne.s32.totalorder %s97, %s111
      %p113 = scmp.eq.s32.totalorder %s24, 0
      %p114 = por %p112, %p113
      %s116 = sadd.s32 %s115, 1
      %p119 = scmp.eq.s32.totalorder %s18, 1
      %p120 = scmp.ne.s32.totalorder %s115, %s117
      %p121 = scmp.eq.s32.totalorder %s18, 0
      %p122 = por %p120, %p121
      %p123 = scmp.ne.s32.totalorder %s115, %s117
      %p124 = scmp.eq.s32.totalorder %s23, 1
      %p125 = por %p123, %p124
      %p126 = scmp.ne.s32.totalorder %s117, %s118
      %p127 = scmp.eq.s32.totalorder %s23, 0
      %p128 = por %p126, %p127
      %p129 = scmp.ne.s32.totalorder %s117, %s118
      %p130 = scmp.eq.s32.totalorder %s24, 1
      %p131 = por %p129, %p130
      %p133 = scmp.ne.s32.totalorder %s118, %s132
      %p134 = scmp.eq.s32.totalorder %s24, 0
      %p135 = por %p133, %p134
      %s136 = ssub.s32 %s18, %s25
      %p137 = scmp.eq.s32.totalorder %s136, 0
      %s139 = sadd.s32 %s138, 1
      %s140 = scalar_select %p137, %s138, %s139
      %p143 = pneg %p137
      %p144 = scmp.eq.s32.totalorder %s18, 1
      %p145 = por %p143, %p144
      %p146 = scmp.ne.s32.totalorder %s138, %s141
      %p147 = scmp.eq.s32.totalorder %s18, 0
      %p148 = por %p146, %p147
      %p149 = scmp.ne.s32.totalorder %s138, %s141
      %p150 = scmp.eq.s32.totalorder %s23, 1
      %p151 = por %p149, %p150
      %p152 = scmp.ne.s32.totalorder %s141, %s142
      %p153 = scmp.eq.s32.totalorder %s23, 0
      %p154 = por %p152, %p153
      %p155 = scmp.ne.s32.totalorder %s141, %s142
      %p156 = scmp.eq.s32.totalorder %s24, 1
      %p157 = por %p155, %p156
      %p159 = scmp.ne.s32.totalorder %s142, %s158
      %p160 = scmp.eq.s32.totalorder %s24, 0
      %p161 = por %p159, %p160
      %p162 = scmp.le.s32.totalorder 1, %s18
      %p163 = scmp.lt.s32.totalorder %s18, 3
      %p164 = pnand %p162, %p163
      %p165 = pneg %p164
      // Predicated region
      $region9: #{tpu_custom_call.1} parent=5 // pred_check
        _
      $region10: #{tpu_custom_call.1} parent=5 // pred_check_branch
        %167 = sbr.rel (%p164) target = $region12
      $region11: #{tpu_custom_call.1} parent=5 // pred_region
        %s168 = ssub.s32 %s18, 1
        // Predicated region
        $region13: #{tpu_custom_call.1} parent=11 // pred_check
          %p169 = pneg %p65
        $region14: #{tpu_custom_call.1} parent=11 // pred_check_branch
          %171 = sbr.rel (%p169) target = $region16
        $region15: #{tpu_custom_call.1} parent=11 // pred_region
          %s173 = ssub.s32 1024, 1024
          %174 = vsyncadd [#allocation6], %s173
          %s175 = sshll.u32 [#allocation5], 4
          %s176 = int_to_ptr.vmem [resolvable:$true] %s175
          %181 = dma.hbm_to_vmem [thread:$0]  %s1, 1024, %s176, [#allocation6], 64, 64, 4
        $region16: #{tpu_custom_call.1} parent=11 // pred_fallthru
          _
        // Predicated region
        $region17: #{tpu_custom_call.1} parent=11 // pred_check
          %p182 = pneg %p86
        $region18: #{tpu_custom_call.1} parent=11 // pred_check_branch
          %184 = sbr.rel (%p182) target = $region20
        $region19: #{tpu_custom_call.1} parent=11 // pred_region
          _
        $region20: #{tpu_custom_call.1} parent=11 // pred_fallthru
          _
        // Predicated region
        $region21: #{tpu_custom_call.1} parent=11 // pred_check
          %p185 = pneg %p107
        $region22: #{tpu_custom_call.1} parent=11 // pred_check_branch
          %187 = sbr.rel (%p185) target = $region24
        $region23: #{tpu_custom_call.1} parent=11 // pred_region
          %s189 = ssub.s32 1024, 1024
          %190 = vsyncadd [#allocation6], %s189
          %s191 = sshll.u32 [#allocation7], 4
          %s192 = int_to_ptr.vmem [resolvable:$true] %s191
          %197 = dma.hbm_to_vmem [thread:$0]  %s3, 1024, %s192, [#allocation6], 64, 64, 4
        $region24: #{tpu_custom_call.1} parent=11 // pred_fallthru
          _
        // Predicated region
        $region25: #{tpu_custom_call.1} parent=11 // pred_check
          %p198 = pneg %p128
        $region26: #{tpu_custom_call.1} parent=11 // pred_check_branch
          %200 = sbr.rel (%p198) target = $region28
        $region27: #{tpu_custom_call.1} parent=11 // pred_region
          _
        $region28: #{tpu_custom_call.1} parent=11 // pred_fallthru
          _
      $region12: #{tpu_custom_call.1} parent=5 // pred_fallthru
        _
      %p201 = scmp.lt.s32.totalorder %s18, 2
      // Predicated region
      $region29: #{tpu_custom_call.1} parent=5 // pred_check
        %p202 = pneg %p201
      $region30: #{tpu_custom_call.1} parent=5 // pred_check_branch
        %204 = sbr.rel (%p202) target = $region32
      $region31: #{tpu_custom_call.1} parent=5 // pred_region
        // Predicated region
        $region33: #{tpu_custom_call.1} parent=31 // pred_check
          %p205 = pneg %p38
        $region34: #{tpu_custom_call.1} parent=31 // pred_check_branch
          %207 = sbr.rel (%p205) target = $region36
        $region35: #{tpu_custom_call.1} parent=31 // pred_region
          %s208 = sand.u32 %s28, 1
          %s209 = scalar_lea.sflag [#allocation3], %s208
          %s210 = sand.u32 %s28, 1
          %s211 = smul.addr %s210, 4
          %s212 = scalar_lea.vmem [#allocation2], %s211
          %s214 = ssub.s32 64, 64
          %215 = vsyncadd %s209, %s214
          %s216 = smul.addr %s18, 64
          %s217 = scalar_lea.hbm %s0, %s216
          %s219 = sshll.u32 %s212, 4
          %s220 = int_to_ptr.vmem [resolvable:$true] %s219
          %222 = dma.hbm_to_vmem [thread:$0]  %s217, 64, %s220, %s209
        $region36: #{tpu_custom_call.1} parent=31 // pred_fallthru
          _
      $region32: #{tpu_custom_call.1} parent=5 // pred_fallthru
        _
      %p223 = scmp.le.s32.totalorder 1, %s18
      %p224 = scmp.lt.s32.totalorder %s18, 3
      %p225 = pnand %p223, %p224
      %p226 = pneg %p225
      // Predicated region
      $region37: #{tpu_custom_call.1} parent=5 // pred_check
        _
      $region38: #{tpu_custom_call.1} parent=5 // pred_check_branch
        %228 = sbr.rel (%p225) target = $region40
      $region39: #{tpu_custom_call.1} parent=5 // pred_region
        %s229 = ssub.s32 %s18, 1
        %s230 = sand.u32 %s31, 1
        %s231 = scalar_lea.sflag [#allocation3], %s230
        %s232 = sand.u32 %s31, 1
        %s233 = smul.addr %s232, 4
        %s234 = scalar_lea.vmem [#allocation2], %s233
        // Predicated region
        $region41: #{tpu_custom_call.1} parent=39 // pred_check
          %p235 = pneg %p44
        $region42: #{tpu_custom_call.1} parent=39 // pred_check_branch
          %237 = sbr.rel (%p235) target = $region44
        $region43: #{tpu_custom_call.1} parent=39 // pred_region
          %238 = dma.done %s231, 64
        $region44: #{tpu_custom_call.1} parent=39 // pred_fallthru
          _
        // Predicated region
        $region45: #{tpu_custom_call.1} parent=39 // pred_check
          %p239 = pneg %p65
        $region46: #{tpu_custom_call.1} parent=39 // pred_check_branch
          %241 = sbr.rel (%p239) target = $region48
        $region47: #{tpu_custom_call.1} parent=39 // pred_region
          %242 = dma.done [#allocation6], 1024
        $region48: #{tpu_custom_call.1} parent=39 // pred_fallthru
          _
        // Predicated region
        $region49: #{tpu_custom_call.1} parent=39 // pred_check
          %p243 = pneg %p107
        $region50: #{tpu_custom_call.1} parent=39 // pred_check_branch
          %245 = sbr.rel (%p243) target = $region52
        $region51: #{tpu_custom_call.1} parent=39 // pred_region
          %246 = dma.done [#allocation6], 1024
        $region52: #{tpu_custom_call.1} parent=39 // pred_fallthru
          _
        %s247 = sand.u32 %s31, 1
        %s248 = scalar_lea.sflag [#allocation3], %s247
        %s249 = sand.u32 %s31, 1
        %s250 = smul.addr %s249, 4
        %s251 = scalar_lea.vmem [#allocation2], %s250
        %p252 = pneg %p44
        %p253 = pneg %p41
        %p254 = pneg %p65
        %p255 = pneg %p62
        %p256 = pneg %p86
        %p257 = pneg %p83
        %p258 = pneg %p107
        %p259 = pneg %p104
        %p260 = pneg %p128
        %p261 = pneg %p125
        %p262 = pneg %p154
        %p263 = pneg %p151
        %s264 = sand.u32 %s141, 1
        %s265 = scalar_lea.sflag [#allocation4], %s264
        %s266 = sand.u32 %s141, 1
        %s267 = smul.addr %s266, 8
        %s268 = scalar_lea.vmem [#allocation8], %s267
        %v270 = vld [vmem:[%s234] sm:$0xf]
        %v271 = vld [vmem:[#allocation5] sm:$0xf]
        %v272 = vld [vmem:[#allocation5 + $0x4] sm:$0xf]
        %v273 = vld [vmem:[#allocation5 + $0x8] sm:$0xf]
        %v274 = vld [vmem:[#allocation5 + $0xc] sm:$0xf]
        %v275 = vld [vmem:[#allocation5 + $0x10] sm:$0xf]
        %v276 = vld [vmem:[#allocation5 + $0x14] sm:$0xf]
        %v277 = vld [vmem:[#allocation5 + $0x18] sm:$0xf]
        %v278 = vld [vmem:[#allocation5 + $0x1c] sm:$0xf]
        %v279 = vld [vmem:[#allocation5 + $0x20] sm:$0xf]
        %v280 = vld [vmem:[#allocation5 + $0x24] sm:$0xf]
        %v281 = vld [vmem:[#allocation5 + $0x28] sm:$0xf]
        %v282 = vld [vmem:[#allocation5 + $0x2c] sm:$0xf]
        %v283 = vld [vmem:[#allocation5 + $0x30] sm:$0xf]
        %v284 = vld [vmem:[#allocation5 + $0x34] sm:$0xf]
        %v285 = vld [vmem:[#allocation5 + $0x38] sm:$0xf]
        %v286 = vld [vmem:[#allocation5 + $0x3c] sm:$0xf]
        %v287 = vld [vmem:[%s2] sm:$0x1]
        %v289 = vlaneseq
        %v290 = vshrl.u32 %v289, 7
        %v291 = vsub.s32 0, %v290
        %v292 = vrot.slane %v287, %v291
        %v310 = vunpack.c.l.b16 %v271
        %v311 = vunpack.c.l.b16 %v272
        %v312 = vunpack.c.l.b16 %v273
        %v313 = vunpack.c.l.b16 %v274
        %v314 = vunpack.c.l.b16 %v275
        %v315 = vunpack.c.l.b16 %v276
        %v316 = vunpack.c.l.b16 %v277
        %v317 = vunpack.c.l.b16 %v278
        %v318 = vunpack.c.l.b16 %v279
        %v319 = vunpack.c.l.b16 %v280
        %v320 = vunpack.c.l.b16 %v281
        %v321 = vunpack.c.l.b16 %v282
        %v322 = vunpack.c.l.b16 %v283
        %v323 = vunpack.c.l.b16 %v284
        %v324 = vunpack.c.l.b16 %v285
        %v325 = vunpack.c.l.b16 %v286
        %v326 = vpack.c.b16 %v311, %v310
        %v327 = vpack.c.b16 %v313, %v312
        %v328 = vpack.c.b16 %v315, %v314
        %v329 = vpack.c.b16 %v317, %v316
        %v330 = vpack.c.b16 %v319, %v318
        %v331 = vpack.c.b16 %v321, %v320
        %v332 = vpack.c.b16 %v323, %v322
        %v333 = vpack.c.b16 %v325, %v324
        %342 = vmatprep.subr.bf16.mxu0 0
        %343 = vmatpush1.bf16.msra.mxu0 %v333
        %344 = vmatprep.subr.bf16.mxu0 0
        %345 = vmatpush1.bf16.msra.mxu0 %v332
        %346 = vmatprep.subr.bf16.mxu0 0
        %347 = vmatpush1.bf16.msra.mxu0 %v331
        %348 = vmatprep.subr.bf16.mxu0 0
        %349 = vmatpush1.bf16.msra.mxu0 %v330
        %350 = vmatprep.subr.bf16.mxu0 0
        %351 = vmatpush1.bf16.msra.mxu0 %v329
        %352 = vmatprep.subr.bf16.mxu0 0
        %353 = vmatpush1.bf16.msra.mxu0 %v328
        %354 = vmatprep.subr.bf16.mxu0 0
        %355 = vmatpush1.bf16.msra.mxu0 %v327
        %356 = vmatprep.subr.bf16.mxu0 0
        %357 = vmatpush1.bf16.msra.mxu0 %v326
        %358 = vmatprep.subr.bf16.mxu0 0
        %359 = vmatpush2.bf16.msra.mxu0 0
        %360 = vmatprep.subr.bf16.mxu0 0
        %361 = vmatpush2.bf16.msra.mxu0 0
        %362 = vmatprep.subr.bf16.mxu0 0
        %363 = vmatpush2.bf16.msra.mxu0 0
        %364 = vmatprep.subr.bf16.mxu0 0
        %365 = vmatpush2.bf16.msra.mxu0 0
        %366 = vmatprep.subr.bf16.mxu0 0
        %367 = vmatpush2.bf16.msra.mxu0 0
        %368 = vmatprep.subr.bf16.mxu0 0
        %369 = vmatpush2.bf16.msra.mxu0 0
        %370 = vmatprep.subr.bf16.mxu0 0
        %371 = vmatpush2.bf16.msra.mxu0 0
        %372 = vmatprep.subr.bf16.mxu0 0
        %373 = vmatpush2.bf16.msra.mxu0 0
        %374 = vmatprep.mubr.bf16.mxu0 0
        %375 = vmatmul.mubr.bf16.gmra.mxu0 %v270
        %v376 = vpop.f32.mrf.mxu0
        %v377 = vadd.f32 %v292, %v376
        %v378 = vpop.f32.mrf.mxu0
        %v379 = vpop.f32.mrf.mxu0
        %v380 = vpop.f32.mrf.mxu0
        %381 = vdwg.mxu0
        %v382 = vmul.f32 %v377, 0.5
        %v383 = vmul.f32 %v377, 0.7978846
        %v384 = vmul.f32 %v377, 0.044715
        %v385 = vmul.f32 %v384, %v377
        %v386 = vadd.f32 %v385, 1.0
        %v387 = vmul.f32 %v383, %v386
        %v388 = vtanh.pop %v387
        %v389 = vadd.f32 %v388, 1.0
        %v390 = vmul.f32 %v382, %v389
        %v391 = vpack.c.bf16 %v390, %v390
        %v392 = vld [vmem:[#allocation7] sm:$0xf]
        %v393 = vld [vmem:[#allocation7 + $0x4] sm:$0xf]
        %v394 = vld [vmem:[#allocation7 + $0x8] sm:$0xf]
        %v395 = vld [vmem:[#allocation7 + $0xc] sm:$0xf]
        %v396 = vld [vmem:[#allocation7 + $0x10] sm:$0xf]
        %v397 = vld [vmem:[#allocation7 + $0x14] sm:$0xf]
        %v398 = vld [vmem:[#allocation7 + $0x18] sm:$0xf]
        %v399 = vld [vmem:[#allocation7 + $0x1c] sm:$0xf]
        %v400 = vld [vmem:[#allocation7 + $0x20] sm:$0xf]
        %v401 = vld [vmem:[#allocation7 + $0x24] sm:$0xf]
        %v402 = vld [vmem:[#allocation7 + $0x28] sm:$0xf]
        %v403 = vld [vmem:[#allocation7 + $0x2c] sm:$0xf]
        %v404 = vld [vmem:[#allocation7 + $0x30] sm:$0xf]
        %v405 = vld [vmem:[#allocation7 + $0x34] sm:$0xf]
        %v406 = vld [vmem:[#allocation7 + $0x38] sm:$0xf]
        %v407 = vld [vmem:[#allocation7 + $0x3c] sm:$0xf]
        %v408 = vld [vmem:[%s4] sm:$0x1]
        %v410 = vlaneseq
        %v411 = vshrl.u32 %v410, 7
        %v412 = vsub.s32 0, %v411
        %v413 = vrot.slane %v408, %v412
        %v431 = vunpack.c.l.b16 %v392
        %v432 = vunpack.c.l.b16 %v393
        %v433 = vunpack.c.l.b16 %v394
        %v434 = vunpack.c.l.b16 %v395
        %v435 = vunpack.c.l.b16 %v396
        %v436 = vunpack.c.l.b16 %v397
        %v437 = vunpack.c.l.b16 %v398
        %v438 = vunpack.c.l.b16 %v399
        %v439 = vunpack.c.l.b16 %v400
        %v440 = vunpack.c.l.b16 %v401
        %v441 = vunpack.c.l.b16 %v402
        %v442 = vunpack.c.l.b16 %v403
        %v443 = vunpack.c.l.b16 %v404
        %v444 = vunpack.c.l.b16 %v405
        %v445 = vunpack.c.l.b16 %v406
        %v446 = vunpack.c.l.b16 %v407
        %v447 = vpack.c.b16 %v432, %v431
        %v448 = vpack.c.b16 %v434, %v433
        %v449 = vpack.c.b16 %v436, %v435
        %v450 = vpack.c.b16 %v438, %v437
        %v451 = vpack.c.b16 %v440, %v439
        %v452 = vpack.c.b16 %v442, %v441
        %v453 = vpack.c.b16 %v444, %v443
        %v454 = vpack.c.b16 %v446, %v445
        %463 = vmatprep.subr.bf16.mxu0 0
        %464 = vmatpush1.bf16.msra.mxu0 %v454
        %465 = vmatprep.subr.bf16.mxu0 0
        %466 = vmatpush1.bf16.msra.mxu0 %v453
        %467 = vmatprep.subr.bf16.mxu0 0
        %468 = vmatpush1.bf16.msra.mxu0 %v452
        %469 = vmatprep.subr.bf16.mxu0 0
        %470 = vmatpush1.bf16.msra.mxu0 %v451
        %471 = vmatprep.subr.bf16.mxu0 0
        %472 = vmatpush1.bf16.msra.mxu0 %v450
        %473 = vmatprep.subr.bf16.mxu0 0
        %474 = vmatpush1.bf16.msra.mxu0 %v449
        %475 = vmatprep.subr.bf16.mxu0 0
        %476 = vmatpush1.bf16.msra.mxu0 %v448
        %477 = vmatprep.subr.bf16.mxu0 0
        %478 = vmatpush1.bf16.msra.mxu0 %v447
        %479 = vmatprep.subr.bf16.mxu0 0
        %480 = vmatpush2.bf16.msra.mxu0 0
        %481 = vmatprep.subr.bf16.mxu0 0
        %482 = vmatpush2.bf16.msra.mxu0 0
        %483 = vmatprep.subr.bf16.mxu0 0
        %484 = vmatpush2.bf16.msra.mxu0 0
        %485 = vmatprep.subr.bf16.mxu0 0
        %486 = vmatpush2.bf16.msra.mxu0 0
        %487 = vmatprep.subr.bf16.mxu0 0
        %488 = vmatpush2.bf16.msra.mxu0 0
        %489 = vmatprep.subr.bf16.mxu0 0
        %490 = vmatpush2.bf16.msra.mxu0 0
        %491 = vmatprep.subr.bf16.mxu0 0
        %492 = vmatpush2.bf16.msra.mxu0 0
        %493 = vmatprep.subr.bf16.mxu0 0
        %494 = vmatpush2.bf16.msra.mxu0 0
        %495 = vmatprep.mubr.bf16.mxu0 0
        %496 = vmatmul.mubr.bf16.gmra.mxu0 %v391
        %v497 = vpop.f32.mrf.mxu0
        %v498 = vadd.f32 %v413, %v497
        %v499 = vpop.f32.mrf.mxu0
        %v500 = vpop.f32.mrf.mxu0
        %v501 = vpop.f32.mrf.mxu0
        %502 = vdwg.mxu0
        %503 = vst [vmem:[%s268] sm:$0xff] %v498
        %s504 = sand.u32 %s141, 1
        %s505 = scalar_lea.sflag [#allocation4], %s504
        %s506 = sand.u32 %s141, 1
        %s507 = smul.addr %s506, 8
        %s508 = scalar_lea.vmem [#allocation8], %s507
        // Predicated region
        $region53: #{tpu_custom_call.1} parent=39 // pred_check
          %p509 = pneg %p151
        $region54: #{tpu_custom_call.1} parent=39 // pred_check_branch
          %511 = sbr.rel (%p509) target = $region56
        $region55: #{tpu_custom_call.1} parent=39 // pred_region
          %s513 = ssub.s32 128, 128
          %514 = vsyncadd %s505, %s513
          %s515 = smul.addr %s23, 128
          %s516 = scalar_lea.hbm %s5, %s515
          %s518 = sshll.u32 %s508, 4
          %s519 = int_to_ptr.vmem [resolvable:$true] %s518
          %521 = dma.vmem_to_hbm [thread:$0]  %s519, 128, %s516, %s505
        $region56: #{tpu_custom_call.1} parent=39 // pred_fallthru
          _
      $region40: #{tpu_custom_call.1} parent=5 // pred_fallthru
        _
      %p522 = scmp.le.s32.totalorder 2, %s18
      // Predicated region
      $region57: #{tpu_custom_call.1} parent=5 // pred_check
        %p523 = pneg %p522
      $region58: #{tpu_custom_call.1} parent=5 // pred_check_branch
        %525 = sbr.rel (%p523) target = $region60
      $region59: #{tpu_custom_call.1} parent=5 // pred_region
        %s526 = ssub.s32 %s18, 2
        // Predicated region
        $region61: #{tpu_custom_call.1} parent=59 // pred_check
          %p527 = pneg %p157
        $region62: #{tpu_custom_call.1} parent=59 // pred_check_branch
          %529 = sbr.rel (%p527) target = $region64
        $region63: #{tpu_custom_call.1} parent=59 // pred_region
          %s530 = sand.u32 %s142, 1
          %s531 = scalar_lea.sflag [#allocation4], %s530
          %s532 = sand.u32 %s142, 1
          %s533 = smul.addr %s532, 8
          %s534 = scalar_lea.vmem [#allocation8], %s533
          %535 = dma.done %s531, 128
        $region64: #{tpu_custom_call.1} parent=59 // pred_fallthru
          _
      $region60: #{tpu_custom_call.1} parent=5 // pred_fallthru
        _
    $region6: #{tpu_custom_call.1} parent=1 // loop_footer
      %s22 = sadd.s32 1, %s18
    $region7: #{tpu_custom_call.1} parent=1 // loop_footer_branch
      %17 = sbr.rel target = $region3
    $region8: #{tpu_custom_call.1} parent=1 // loop_exit
      _
    %536 = vsyncpa [#allocation3], 1
    %s537 = scalar_lea.sflag [#allocation3], 1
    %538 = vsyncpa %s537, 1
    %539 = vsyncpa [#allocation6], 1
    %540 = vsyncpa [#allocation4], 1
    %s541 = scalar_lea.sflag [#allocation4], 1
    %542 = vsyncpa %s541, 1

</llo_original>
